<compile_context>
chip_gen: v7x
topology: tpu7x:2x2x1
jax: 0.10.0
libtpu: 0.0.40
codegen_flags: <defaults>
</compile_context>

<pallas_src>
import functools

import jax
import jax.numpy as jnp
from jax import lax
from jax.experimental import pallas as pl
from jax.experimental.pallas import tpu as pltpu


def _npair_kernel(t_col_ref, t_row_ref, a_ref, p_ref, out_ref,
                  logit_acc, l2a_acc, l2p_acc, *, l2_reg, inv_row_blocks):
    """Row block i = pl.program_id(0); D-reduction step k = pl.program_id(1)."""
    k = pl.program_id(1)
    nk = pl.num_programs(1)

    @pl.when(k == 0)
    def _init():
        logit_acc[...] = jnp.zeros_like(logit_acc)
        l2a_acc[...] = jnp.zeros_like(l2a_acc)
        l2p_acc[...] = jnp.zeros_like(l2p_acc)

    a = a_ref[...]                       # [tb, tk] native dtype (f32 / bf16)
    p = p_ref[...]                       # [B,  tk]

    # Partial logit += a @ p^T (transposed contraction, MXU, f32 accumulate).
    logit_acc[...] += lax.dot_general(
        a, p,
        dimension_numbers=(((1,), (1,)), ((), ())),
        preferred_element_type=jnp.float32,
    )

    # L2 partial sums: lane-reduced VECTOR accumulators in VMEM (no per-step
    # scalar RMW chain on the scalar path).
    af = a.astype(jnp.float32)
    pf = p.astype(jnp.float32)
    l2a_acc[...] += jnp.sum(af * af, axis=1, keepdims=True)   # [tb, 1]
    l2p_acc[...] += jnp.sum(pf * pf, axis=1, keepdims=True)   # [B, 1]

    @pl.when(k == nk - 1)
    def _epilogue():
        logit = logit_acc[...]                               # [tb, B] f32
        t_col = t_col_ref[...]                               # [tb, 1] int32
        t_row = t_row_ref[...]                               # [1,  B] int32

        mask = (t_col == t_row).astype(jnp.float32)          # [tb, B]
        count = jnp.sum(mask, axis=-1, keepdims=True)        # [tb, 1] (>= 1)

        # Stable row-wise log-sum-exp.
        m = jnp.max(logit, axis=-1, keepdims=True)
        lse = jnp.log(jnp.sum(jnp.exp(logit - m), axis=-1, keepdims=True)) + m

        # sum_j -(mask/count)_ij * log_softmax(logit)_ij = lse_i - weighted_i/count_i
        weighted = jnp.sum(mask * logit, axis=-1, keepdims=True)
        per_row = lse - weighted * pl.reciprocal(count)       # exact reciprocal
        ce_part = jnp.sum(per_row)

        # Every row block streams the full `positive`, so its square-sum is
        # counted once per row block; rescale so the wrapper total is exact.
        l2_part = (jnp.sum(l2a_acc[...])
                   + jnp.sum(l2p_acc[...]) * jnp.float32(inv_row_blocks))

        partial = ce_part + jnp.float32(0.25 * l2_reg) * l2_part
        # Lane-dense (8,128) output block; every element holds the same value,
        # the wrapper reads element [i, 0, 0].
        out_ref[...] = jnp.broadcast_to(partial, out_ref.shape).astype(jnp.float32)


def _round_up(x, m):
    return ((x + m - 1) // m) * m


def _choose_row_block(B, row_block):
    """Row-tile tb.  Stays the full batch unless the (B, B) f32 accumulator
    would strain scoped VMEM (or the caller forces a tile); when tiling, pick
    the largest aligned divisor to minimise re-reads of `positive`."""
    if (row_block is not None and B % row_block == 0
            and (row_block % 8 == 0 or row_block == B)):
        return row_block
    if B * B * 4 <= 16 * 1024 * 1024:       # accumulator fits comfortably
        return B
    for tb in (1024, 512, 256, 128):
        if B % tb == 0 and tb * B * 4 <= 16 * 1024 * 1024:
            return tb
    return B


def _choose_d_block(D_pad, B, tb, itemsize):
    """Largest lane-aligned D block that divides padded D, keeps >= 2 pipeline
    steps and fits the double-buffered input budget."""
    budget = 16 * 1024 * 1024               # anchor + positive, 2 buffers each
    for tk in (8192, 4096, 2048, 1024, 512, 256, 128):
        if (D_pad % tk == 0 and D_pad // tk >= 2
                and 2 * (tb + B) * tk * itemsize <= budget):
            return tk
    return 128


def npair_loss(anchor, positive, target, l2_reg=0.02, *, row_block=None):
    """Pallas implementation of NpairLoss.forward (returns a scalar)."""
    B, D = anchor.shape
    itemsize = jnp.dtype(anchor.dtype).itemsize

    t_col = target.reshape(B, 1).astype(jnp.int32)
    t_row = target.reshape(1, B).astype(jnp.int32)     # lane-dense label row

    # Zero-pad D so there are always >= 2 lane-aligned reduction steps
    # (zeros contribute nothing to the logits or the L2 penalty).
    D_pad = max(256, _round_up(D, 128))
    if D_pad != D:
        pad = ((0, 0), (0, D_pad - D))
        anchor = jnp.pad(anchor, pad)
        positive = jnp.pad(positive, pad)

    tb = _choose_row_block(B, row_block)
    nb = B // tb
    tk = _choose_d_block(D_pad, B, tb, itemsize)
    nk = D_pad // tk

    kernel = functools.partial(_npair_kernel, l2_reg=float(l2_reg),
                               inv_row_blocks=1.0 / nb)

    vmem_need = (2 * (tb + B) * tk * itemsize     # double-buffered input blocks
                 + tb * B * 4                     # logit accumulator
                 + (tb + B) * 128 * 4             # L2 accumulators (lane padded)
                 + 4 * (tb + B) * 128 * 4         # target blocks + slack
                 + nb * 8 * 128 * 4)              # output blocks
    vmem_limit = int(min(max(2 * vmem_need, 16 << 20), 64 << 20))

    cost = pl.CostEstimate(
        flops=int(2 * B * B * D_pad),
        transcendentals=int(B * B),               # exp in the row-wise softmax
        bytes_accessed=int((1 + nb) * B * D_pad * itemsize + B * B * 4),
    )

    out = pl.pallas_call(
        kernel,
        out_shape=jax.ShapeDtypeStruct((nb, 8, 128), jnp.float32),
        grid_spec=pltpu.PrefetchScalarGridSpec(
            num_scalar_prefetch=0,
            grid=(nb, nk),
            in_specs=[
                pl.BlockSpec((tb, 1), lambda i, k: (i, 0)),    # target column
                pl.BlockSpec((1, B), lambda i, k: (0, 0)),     # target row
                pl.BlockSpec((tb, tk), lambda i, k: (i, k)),   # anchor block
                pl.BlockSpec((B, tk), lambda i, k: (0, k)),    # positive block
            ],
            out_specs=pl.BlockSpec((1, 8, 128), lambda i, k: (i, 0, 0)),
            scratch_shapes=[
                pltpu.VMEM((tb, B), jnp.float32),   # logit accumulator
                pltpu.VMEM((tb, 1), jnp.float32),   # anchor L2 accumulator
                pltpu.VMEM((B, 1), jnp.float32),    # positive L2 accumulator
            ],
        ),
        compiler_params=pltpu.CompilerParams(
            dimension_semantics=("parallel", "arbitrary"),
            vmem_limit_bytes=vmem_limit,
        ),
        cost_estimate=cost,
    )(t_col, t_row, anchor, positive)

    return jnp.sum(out[:, 0, 0]) / jnp.float32(B)


def _reference_npair_loss(anchor, positive, target, l2_reg=0.02):
    """Pure-JAX reference mirroring the PyTorch module."""
    B = anchor.shape[0]
    t = target.reshape(B, 1)
    tmat = (t == t.T).astype(jnp.float32)
    tmat = tmat / jnp.sum(tmat, axis=1, keepdims=True)
    logit = anchor @ positive.T
    logp = jax.nn.log_softmax(logit, axis=-1)
    loss_ce = jnp.mean(jnp.sum(-tmat * logp, axis=-1))
    l2 = jnp.sum(anchor ** 2) / B + jnp.sum(positive ** 2) / B
    return loss_ce + l2_reg * l2 * 0.25


if __name__ == "__main__":
    key = jax.random.PRNGKey(0)
    k1, k2, k3, k4, k5, k6, k7, k8, k9 = jax.random.split(key, 9)

    # 1) Small shapes consistent with the module (D padded to 256, 2 steps).
    B, D = 8, 32
    anchor = jax.random.normal(k1, (B, D), dtype=jnp.float32)
    positive = jax.random.normal(k2, (B, D), dtype=jnp.float32)
    target = jax.random.randint(k3, (B,), 0, 4, dtype=jnp.int32)

    loss = jax.block_until_ready(npair_loss(anchor, positive, target, l2_reg=0.02))
    ref = _reference_npair_loss(anchor, positive, target, l2_reg=0.02)
    assert jnp.allclose(loss, ref, rtol=1e-5, atol=1e-5), (loss, ref)

    # 2) Larger embedding dim exercises the D-reduction grid (tk=256, 2 steps).
    B2, D2 = 64, 512
    anchor2 = jax.random.normal(k4, (B2, D2), dtype=jnp.float32)
    positive2 = jax.random.normal(k5, (B2, D2), dtype=jnp.float32)
    target2 = jax.random.randint(k6, (B2,), 0, 8, dtype=jnp.int32)

    loss2 = jax.block_until_ready(npair_loss(anchor2, positive2, target2, l2_reg=0.02))
    ref2 = _reference_npair_loss(anchor2, positive2, target2, l2_reg=0.02)
    assert jnp.allclose(loss2, ref2, rtol=1e-4, atol=1e-4), (loss2, ref2)

    # 3) Forced row tiling exercises the parallel row-block axis (nb=2).
    B3, D3 = 256, 512
    anchor3 = jax.random.normal(k7, (B3, D3), dtype=jnp.float32)
    positive3 = jax.random.normal(k8, (B3, D3), dtype=jnp.float32)
    target3 = jax.random.randint(k9, (B3,), 0, 16, dtype=jnp.int32)

    loss3 = jax.block_until_ready(
        npair_loss(anchor3, positive3, target3, l2_reg=0.02, row_block=128))
    ref3 = _reference_npair_loss(anchor3, positive3, target3, l2_reg=0.02)
    assert jnp.allclose(loss3, ref3, rtol=2e-4, atol=2e-4), (loss3, ref3)

    print("KERNEL_OK")
</pallas_src>

<mosaic_0001>
module attributes {stable_mosaic.version = 11 : i64} {
  func.func @_npair_kernel(%arg0: i32, %arg1: i32, %arg2: memref<8x1xi32, #tpu.memory_space<vmem>>, %arg3: memref<1x8xi32, #tpu.memory_space<vmem>>, %arg4: memref<8x128xf32, #tpu.memory_space<vmem>>, %arg5: memref<8x128xf32, #tpu.memory_space<vmem>>, %arg6: memref<1x8x128xf32, #tpu.memory_space<vmem>>, %arg7: memref<8x8xf32, #tpu.memory_space<vmem>>, %arg8: memref<8x1xf32, #tpu.memory_space<vmem>>, %arg9: memref<8x1xf32, #tpu.memory_space<vmem>>) attributes {dimension_semantics = [#tpu.dimension_semantics<parallel>, #tpu.dimension_semantics<arbitrary>], iteration_bounds = array<i64: 1, 2>, scalar_prefetch = 0 : i64, scratch_operands = 3 : i64, tpu.core_type = #tpu.core_type<tc>, window_params = [{transform_indices = @transform_0, window_bounds = array<i64: 8, 1>}, {pipeline_mode = #tpu.pipeline_mode<synchronous>, transform_indices = @transform_1, window_bounds = array<i64: 1, 8>}, {transform_indices = @transform_2, window_bounds = array<i64: 8, 128>}, {transform_indices = @transform_3, window_bounds = array<i64: 8, 128>}, {transform_indices = @transform_4, window_bounds = array<i64: 1, 8, 128>}]} {
    %c0_i32 = arith.constant 0 : i32
    %0 = arith.cmpi eq, %arg1, %c0_i32 : i32
    %1 = arith.extui %0 : i1 to i32
    %c0_i32_0 = arith.constant 0 : i32
    %2 = arith.cmpi ne, %1, %c0_i32_0 : i32
    scf.if %2 {
      %cst_19 = arith.constant 0.000000e+00 : f32
      %24 = vector.broadcast %cst_19 : f32 to vector<8x8xf32>
      %c0_20 = arith.constant 0 : index
      %c0_21 = arith.constant 0 : index
      %25 = vector.load %arg7[%c0_20, %c0_21] : memref<8x8xf32, #tpu.memory_space<vmem>>, vector<8x8xf32>
      tpu.vector_store %arg7[%c0_20, %c0_21], %24 {strides = array<i32>} : memref<8x8xf32, #tpu.memory_space<vmem>>, vector<8x8xf32>,
      %cst_22 = arith.constant 0.000000e+00 : f32
      %26 = vector.broadcast %cst_22 : f32 to vector<8x1xf32>
      %c0_23 = arith.constant 0 : index
      %c0_24 = arith.constant 0 : index
      %27 = vector.load %arg8[%c0_23, %c0_24] : memref<8x1xf32, #tpu.memory_space<vmem>>, vector<8x1xf32>
      tpu.vector_store %arg8[%c0_23, %c0_24], %26 {strides = array<i32>} : memref<8x1xf32, #tpu.memory_space<vmem>>, vector<8x1xf32>,
      %cst_25 = arith.constant 0.000000e+00 : f32
      %28 = vector.broadcast %cst_25 : f32 to vector<8x1xf32>
      %c0_26 = arith.constant 0 : index
      %c0_27 = arith.constant 0 : index
      %29 = vector.load %arg9[%c0_26, %c0_27] : memref<8x1xf32, #tpu.memory_space<vmem>>, vector<8x1xf32>
      tpu.vector_store %arg9[%c0_26, %c0_27], %28 {strides = array<i32>} : memref<8x1xf32, #tpu.memory_space<vmem>>, vector<8x1xf32>,
    } else {
    }
    %c0 = arith.constant 0 : index
    %c0_1 = arith.constant 0 : index
    %3 = vector.load %arg4[%c0, %c0_1] : memref<8x128xf32, #tpu.memory_space<vmem>>, vector<8x128xf32>
    %c0_2 = arith.constant 0 : index
    %c0_3 = arith.constant 0 : index
    %4 = vector.load %arg5[%c0_2, %c0_3] : memref<8x128xf32, #tpu.memory_space<vmem>>, vector<8x128xf32>
    %c0_4 = arith.constant 0 : index
    %c0_5 = arith.constant 0 : index
    %5 = vector.load %arg7[%c0_4, %c0_5] : memref<8x8xf32, #tpu.memory_space<vmem>>, vector<8x8xf32>
    %cst = arith.constant dense<0.000000e+00> : vector<8x8xf32>
    %6 = tpu.matmul %3, %4, %cst {dimension_numbers = #tpu.dot_dimension_numbers<[1], [1], [0], [0], [0, 0, 1, 0], [], []>} : vector<8x128xf32>, vector<8x128xf32>, vector<8x8xf32> -> vector<8x8xf32>
    %7 = arith.addf %5, %6 : vector<8x8xf32>
    %c0_6 = arith.constant 0 : index
    %c0_7 = arith.constant 0 : index
    %8 = vector.load %arg7[%c0_6, %c0_7] : memref<8x8xf32, #tpu.memory_space<vmem>>, vector<8x8xf32>
    tpu.vector_store %arg7[%c0_6, %c0_7], %7 {strides = array<i32>} : memref<8x8xf32, #tpu.memory_space<vmem>>, vector<8x8xf32>,
    %c0_8 = arith.constant 0 : index
    %c0_9 = arith.constant 0 : index
    %9 = vector.load %arg8[%c0_8, %c0_9] : memref<8x1xf32, #tpu.memory_space<vmem>>, vector<8x1xf32>
    %10 = arith.mulf %3, %3 : vector<8x128xf32>
    %cst_10 = arith.constant dense<0.000000e+00> : vector<8xf32>
    %11 = vector.multi_reduction <add>, %10, %cst_10 [1] : vector<8x128xf32> to vector<8xf32>
    %12 = vector.shape_cast %11 : vector<8xf32> to vector<8x1xf32>
    %13 = arith.addf %9, %12 : vector<8x1xf32>
    %c0_11 = arith.constant 0 : index
    %c0_12 = arith.constant 0 : index
    %14 = vector.load %arg8[%c0_11, %c0_12] : memref<8x1xf32, #tpu.memory_space<vmem>>, vector<8x1xf32>
    tpu.vector_store %arg8[%c0_11, %c0_12], %13 {strides = array<i32>} : memref<8x1xf32, #tpu.memory_space<vmem>>, vector<8x1xf32>,
    %c0_13 = arith.constant 0 : index
    %c0_14 = arith.constant 0 : index
    %15 = vector.load %arg9[%c0_13, %c0_14] : memref<8x1xf32, #tpu.memory_space<vmem>>, vector<8x1xf32>
    %16 = arith.mulf %4, %4 : vector<8x128xf32>
    %cst_15 = arith.constant dense<0.000000e+00> : vector<8xf32>
    %17 = vector.multi_reduction <add>, %16, %cst_15 [1] : vector<8x128xf32> to vector<8xf32>
    %18 = vector.shape_cast %17 : vector<8xf32> to vector<8x1xf32>
    %19 = arith.addf %15, %18 : vector<8x1xf32>
    %c0_16 = arith.constant 0 : index
    %c0_17 = arith.constant 0 : index
    %20 = vector.load %arg9[%c0_16, %c0_17] : memref<8x1xf32, #tpu.memory_space<vmem>>, vector<8x1xf32>
    tpu.vector_store %arg9[%c0_16, %c0_17], %19 {strides = array<i32>} : memref<8x1xf32, #tpu.memory_space<vmem>>, vector<8x1xf32>,
    %c1_i32 = arith.constant 1 : i32
    %21 = arith.cmpi eq, %arg1, %c1_i32 : i32
    %22 = arith.extui %21 : i1 to i32
    %c0_i32_18 = arith.constant 0 : i32
    %23 = arith.cmpi ne, %22, %c0_i32_18 : i32
    scf.if %23 {
      %c0_19 = arith.constant 0 : index
      %c0_20 = arith.constant 0 : index
      %24 = vector.load %arg7[%c0_19, %c0_20] : memref<8x8xf32, #tpu.memory_space<vmem>>, vector<8x8xf32>
      %c0_21 = arith.constant 0 : index
      %c0_22 = arith.constant 0 : index
      %25 = vector.load %arg2[%c0_21, %c0_22] : memref<8x1xi32, #tpu.memory_space<vmem>>, vector<8x1xi32>
      %c0_23 = arith.constant 0 : index
      %c0_24 = arith.constant 0 : index
      %26 = vector.load %arg3[%c0_23, %c0_24] : memref<1x8xi32, #tpu.memory_space<vmem>>, vector<1x8xi32>
      %27 = vector.broadcast %25 : vector<8x1xi32> to vector<8x8xi32>
      %28 = vector.broadcast %26 : vector<1x8xi32> to vector<8x8xi32>
      %29 = arith.cmpi eq, %27, %28 : vector<8x8xi32>
      %30 = arith.extui %29 : vector<8x8xi1> to vector<8x8xi32>
      %31 = arith.sitofp %30 : vector<8x8xi32> to vector<8x8xf32>
      %cst_25 = arith.constant dense<0.000000e+00> : vector<8xf32>
      %32 = vector.multi_reduction <add>, %31, %cst_25 [1] : vector<8x8xf32> to vector<8xf32>
      %33 = vector.shape_cast %32 : vector<8xf32> to vector<8x1xf32>
      %cst_26 = arith.constant dense<0xFF800000> : vector<8xf32>
      %34 = vector.multi_reduction <maximumf>, %24, %cst_26 [1] : vector<8x8xf32> to vector<8xf32>
      %35 = vector.shape_cast %34 : vector<8xf32> to vector<8x1xf32>
      %36 = vector.broadcast %35 : vector<8x1xf32> to vector<8x8xf32>
      %37 = arith.subf %24, %36 : vector<8x8xf32>
      %38 = math.exp %37 : vector<8x8xf32>
      %cst_27 = arith.constant dense<0.000000e+00> : vector<8xf32>
      %39 = vector.multi_reduction <add>, %38, %cst_27 [1] : vector<8x8xf32> to vector<8xf32>
      %40 = vector.shape_cast %39 : vector<8xf32> to vector<8x1xf32>
      %41 = math.log %40 : vector<8x1xf32>
      %42 = arith.addf %41, %35 : vector<8x1xf32>
      %43 = arith.mulf %31, %24 : vector<8x8xf32>
      %cst_28 = arith.constant dense<0.000000e+00> : vector<8xf32>
      %44 = vector.multi_reduction <add>, %43, %cst_28 [1] : vector<8x8xf32> to vector<8xf32>
      %45 = vector.shape_cast %44 : vector<8xf32> to vector<8x1xf32>
      %46 = tpu.reciprocal %33 : vector<8x1xf32> -> vector<8x1xf32>
      %47 = arith.mulf %45, %46 : vector<8x1xf32>
      %48 = arith.subf %42, %47 : vector<8x1xf32>
      %49 = vector.shape_cast %48 : vector<8x1xf32> to vector<1x8x1xf32>
      %cst_29 = arith.constant dense<0.000000e+00> : vector<1xf32>
      %50 = vector.multi_reduction <add>, %49, %cst_29 [1, 2] : vector<1x8x1xf32> to vector<1xf32>
      %51 = vector.shape_cast %50 : vector<1xf32> to vector<1x1x1xf32>
      %52 = vector.extract %51[0, 0, 0] : f32 from vector<1x1x1xf32>
      %c0_30 = arith.constant 0 : index
      %c0_31 = arith.constant 0 : index
      %53 = vector.load %arg8[%c0_30, %c0_31] : memref<8x1xf32, #tpu.memory_space<vmem>>, vector<8x1xf32>
      %54 = vector.shape_cast %53 : vector<8x1xf32> to vector<1x8x1xf32>
      %cst_32 = arith.constant dense<0.000000e+00> : vector<1xf32>
      %55 = vector.multi_reduction <add>, %54, %cst_32 [1, 2] : vector<1x8x1xf32> to vector<1xf32>
      %56 = vector.shape_cast %55 : vector<1xf32> to vector<1x1x1xf32>
      %57 = vector.extract %56[0, 0, 0] : f32 from vector<1x1x1xf32>
      %c0_33 = arith.constant 0 : index
      %c0_34 = arith.constant 0 : index
      %58 = vector.load %arg9[%c0_33, %c0_34] : memref<8x1xf32, #tpu.memory_space<vmem>>, vector<8x1xf32>
      %59 = vector.shape_cast %58 : vector<8x1xf32> to vector<1x8x1xf32>
      %cst_35 = arith.constant dense<0.000000e+00> : vector<1xf32>
      %60 = vector.multi_reduction <add>, %59, %cst_35 [1, 2] : vector<1x8x1xf32> to vector<1xf32>
      %61 = vector.shape_cast %60 : vector<1xf32> to vector<1x1x1xf32>
      %62 = vector.extract %61[0, 0, 0] : f32 from vector<1x1x1xf32>
      %cst_36 = arith.constant 1.000000e+00 : f32
      %63 = arith.mulf %62, %cst_36 : f32
      %64 = arith.addf %57, %63 : f32
      %cst_37 = arith.constant 5.000000e-03 : f32
      %65 = arith.mulf %cst_37, %64 : f32
      %66 = arith.addf %52, %65 : f32
      %67 = vector.broadcast %66 : f32 to vector<1x8x128xf32>
      %c0_38 = arith.constant 0 : index
      %c0_39 = arith.constant 0 : index
      %c0_40 = arith.constant 0 : index
      %68 = vector.load %arg6[%c0_38, %c0_39, %c0_40] : memref<1x8x128xf32, #tpu.memory_space<vmem>>, vector<1x8x128xf32>
      tpu.vector_store %arg6[%c0_38, %c0_39, %c0_40], %67 {strides = array<i32>} : memref<1x8x128xf32, #tpu.memory_space<vmem>>, vector<1x8x128xf32>,
    } else {
    }
    return
  }
  func.func @transform_0(%arg0: i32, %arg1: i32) -> (i32, i32) {
    %c0_i32 = arith.constant 0 : i32
    %c0_i32_0 = arith.constant 0 : i32
    return %arg0, %c0_i32 : i32, i32
  }
  func.func @transform_1(%arg0: i32, %arg1: i32) -> (i32, i32) {
    %c0_i32 = arith.constant 0 : i32
    %c0_i32_0 = arith.constant 0 : i32
    %c0_i32_1 = arith.constant 0 : i32
    return %c0_i32, %c0_i32_0 : i32, i32
  }
  func.func @transform_2(%arg0: i32, %arg1: i32) -> (i32, i32) {
    %c0_i32 = arith.constant 0 : i32
    return %arg0, %arg1 : i32, i32
  }
  func.func @transform_3(%arg0: i32, %arg1: i32) -> (i32, i32) {
    %c0_i32 = arith.constant 0 : i32
    %c0_i32_0 = arith.constant 0 : i32
    return %c0_i32, %arg1 : i32, i32
  }
  func.func @transform_4(%arg0: i32, %arg1: i32) -> (i32, i32, i32) {
    %c0_i32 = arith.constant 0 : i32
    %c0_i32_0 = arith.constant 0 : i32
    %c0_i32_1 = arith.constant 0 : i32
    return %arg0, %c0_i32, %c0_i32_0 : i32, i32, i32
  }
}

</mosaic_0001>

<llo_original>
// kernel: tpu_custom_call.1
$region0: #{tpu_custom_call.1}
  #allocation0 [shape = 'u32[]', space=smem, size = 0x4, offset = 0x4, fixed_abs, tag = 'smem constant byte address 0x4 - core index']
  #allocation1 [shape = 'u32[144,128]{1,0:T(1,128)}', space=vmem, size = 0x12000, scoped, tag = 'internal scratch']
  #allocation2 [shape = 'f32[8,8]{1,0:T(8,128)}', space=vmem, size = 0x1000, scoped, tag = 'scratch operand']
  #allocation3 [shape = 'f32[8,1]{1,0:T(8,128)}', space=vmem, size = 0x1000, scoped, tag = 'scratch operand']
  #allocation4 [shape = 'f32[8,1]{1,0:T(8,128)}', space=vmem, size = 0x1000, scoped, tag = 'scratch operand']
  %s0 = inlined_call_operand.vmem [shape: s32[8,1], index: 0, kind: input, shape index: {}]
  %s1 = inlined_call_operand.hbm [shape: s32[1,8], index: 1, kind: input, shape index: {}]
  %s2 = inlined_call_operand.vmem [shape: f32[8,256], index: 2, kind: input, shape index: {}]
  %s3 = inlined_call_operand.hbm [shape: f32[8,256], index: 3, kind: input, shape index: {}]
  %s4 = inlined_call_operand.hbm [shape: f32[1,8,128], index: 4, kind: output, shape index: {}]
  %s5 = sld [smem:[#allocation0]]
  $region65: #{tpu_custom_call.1} parent=0
    _
  %s7 = ssub.s32 1, %s5
  %s8 = scalar_select 0, %s7, %s5
  $region1: #{tpu_custom_call.1} parent=0
    #allocation5 [shape = 'u8[512]{0}', space=vmem, size = 0x400, scoped, tag = 'input window, operand 1, single buffered']
    #allocation6 [shape = 's32[2]{0}', space=sflag, size = 0x8, scoped, tag = 'scoped memory for tpu_custom_call.1']
    #allocation7 [shape = 's32[2]{0}', space=sflag, size = 0x8, scoped, tag = 'scoped memory for tpu_custom_call.1']
    #allocation8 [shape = 'u8[8192]{0}', space=vmem, size = 0x2000, scoped, tag = 'input window, operand 3']
    #allocation9 [shape = 's32[2]{0}', space=sflag, size = 0x8, scoped, tag = 'scoped memory for tpu_custom_call.1']
    #allocation10 [shape = 'u8[4096]{0}', space=vmem, size = 0x1000, scoped, tag = 'output window, operand 0, single buffered']
    %9 = vsyncpa [#allocation6], 0
    %10 = vsyncpa [#allocation9], 0
    %s11 = scalar_lea.sflag [#allocation9], 1
    %12 = vsyncpa %s11, 0
    %13 = vsyncpa [#allocation7], 0
    loop: start=0, step=1, limit=4
    $region2: #{tpu_custom_call.1} parent=1 // loop_pre_header
      _
    $region3: #{tpu_custom_call.1} parent=1 // loop_header
      %s15 = sphi 0, %s19
      %p16 = scmp.ge.s32.totalorder %s15, 4
      %s22 = sphi 0, %s34
      %s23 = sphi 0, %s30
      %s24 = sphi 0, %s22
      %s25 = sphi 0, %s23
      %s26 = sphi 0, %s24
      %s27 = sphi 0, %s25
      %s37 = sphi 0, %s39
      %s40 = sphi 0, %s37
      %s41 = sphi 0, %s40
      %s57 = sphi 0, %s41
      %s61 = sphi 0, %s61
      %s63 = sphi 0, %s61
      %s64 = sphi 0, %s63
      %s78 = sphi 0, %s64
      %s86 = sphi 0, %s88
      %s89 = sphi 0, %s86
      %s90 = sphi 0, %s89
      %s106 = sphi 0, %s90
      %s112 = sphi 0, %s114
      %s115 = sphi 0, %s112
      %s116 = sphi 0, %s115
      %s132 = sphi 0, %s116
      %s138 = sphi 0, %s140
      %s141 = sphi 0, %s138
      %s142 = sphi 0, %s141
      %s158 = sphi 0, %s142
    $region4: #{tpu_custom_call.1} parent=1 // loop_header_branch
      %18 = sbr.rel (%p16) target = $region8
    $region5: #{tpu_custom_call.1} parent=1 // loop_body
      %s20 = ssub.s32 %s15, 1
      %s21 = ssub.s32 %s15, 2
      %s28 = sadd.s32 1, %s23
      %p29 = scmp.ge.s32.totalorder %s28, 2
      %s30 = scalar_select %p29, 0, %s28
      %s31 = sadd.s32 1, %s22
      %s32 = scalar_select %p29, %s31, %s22
      %p33 = scmp.ge.s32.totalorder %s32, 1
      %s34 = scalar_select %p33, 0, %s32
      %s35 = ssub.s32 %s22, %s34
      %p36 = scmp.eq.s32.totalorder %s35, 0
      %s38 = sadd.s32 %s37, 1
      %s39 = scalar_select %p36, %s37, %s38
      %p42 = pneg %p36
      %p43 = scmp.eq.s32.totalorder %s15, 1
      %p44 = por %p42, %p43
      %p45 = scmp.ne.s32.totalorder %s37, %s40
      %p46 = scmp.eq.s32.totalorder %s15, 0
      %p47 = por %p45, %p46
      %p48 = scmp.ne.s32.totalorder %s37, %s40
      %p49 = scmp.eq.s32.totalorder %s20, 1
      %p50 = por %p48, %p49
      %p51 = scmp.ne.s32.totalorder %s40, %s41
      %p52 = scmp.eq.s32.totalorder %s20, 0
      %p53 = por %p51, %p52
      %p54 = scmp.ne.s32.totalorder %s40, %s41
      %p55 = scmp.eq.s32.totalorder %s21, 1
      %p56 = por %p54, %p55
      %p58 = scmp.ne.s32.totalorder %s41, %s57
      %p59 = scmp.eq.s32.totalorder %s21, 0
      %p60 = por %p58, %p59
      %s62 = sadd.s32 %s61, 1
      %p65 = scmp.eq.s32.totalorder %s15, 1
      %p66 = scmp.ne.s32.totalorder %s61, %s63
      %p67 = scmp.eq.s32.totalorder %s15, 0
      %p68 = por %p66, %p67
      %p69 = scmp.ne.s32.totalorder %s61, %s63
      %p70 = scmp.eq.s32.totalorder %s20, 1
      %p71 = por %p69, %p70
      %p72 = scmp.ne.s32.totalorder %s63, %s64
      %p73 = scmp.eq.s32.totalorder %s20, 0
      %p74 = por %p72, %p73
      %p75 = scmp.ne.s32.totalorder %s63, %s64
      %p76 = scmp.eq.s32.totalorder %s21, 1
      %p77 = por %p75, %p76
      %p79 = scmp.ne.s32.totalorder %s64, %s78
      %p80 = scmp.eq.s32.totalorder %s21, 0
      %p81 = por %p79, %p80
      %s82 = ssub.s32 %s22, %s34
      %s83 = ssub.s32 %s23, %s30
      %s84 = sor.u32 %s82, %s83
      %p85 = scmp.eq.s32.totalorder %s84, 0
      %s87 = sadd.s32 %s86, 1
      %s88 = scalar_select %p85, %s86, %s87
      %p91 = pneg %p85
      %p92 = scmp.eq.s32.totalorder %s15, 1
      %p93 = por %p91, %p92
      %p94 = scmp.ne.s32.totalorder %s86, %s89
      %p95 = scmp.eq.s32.totalorder %s15, 0
      %p96 = por %p94, %p95
      %p97 = scmp.ne.s32.totalorder %s86, %s89
      %p98 = scmp.eq.s32.totalorder %s20, 1
      %p99 = por %p97, %p98
      %p100 = scmp.ne.s32.totalorder %s89, %s90
      %p101 = scmp.eq.s32.totalorder %s20, 0
      %p102 = por %p100, %p101
      %p103 = scmp.ne.s32.totalorder %s89, %s90
      %p104 = scmp.eq.s32.totalorder %s21, 1
      %p105 = por %p103, %p104
      %p107 = scmp.ne.s32.totalorder %s90, %s106
      %p108 = scmp.eq.s32.totalorder %s21, 0
      %p109 = por %p107, %p108
      %s110 = ssub.s32 %s23, %s30
      %p111 = scmp.eq.s32.totalorder %s110, 0
      %s113 = sadd.s32 %s112, 1
      %s114 = scalar_select %p111, %s112, %s113
      %p117 = pneg %p111
      %p118 = scmp.eq.s32.totalorder %s15, 1
      %p119 = por %p117, %p118
      %p120 = scmp.ne.s32.totalorder %s112, %s115
      %p121 = scmp.eq.s32.totalorder %s15, 0
      %p122 = por %p120, %p121
      %p123 = scmp.ne.s32.totalorder %s112, %s115
      %p124 = scmp.eq.s32.totalorder %s20, 1
      %p125 = por %p123, %p124
      %p126 = scmp.ne.s32.totalorder %s115, %s116
      %p127 = scmp.eq.s32.totalorder %s20, 0
      %p128 = por %p126, %p127
      %p129 = scmp.ne.s32.totalorder %s115, %s116
      %p130 = scmp.eq.s32.totalorder %s21, 1
      %p131 = por %p129, %p130
      %p133 = scmp.ne.s32.totalorder %s116, %s132
      %p134 = scmp.eq.s32.totalorder %s21, 0
      %p135 = por %p133, %p134
      %s136 = ssub.s32 %s22, %s34
      %p137 = scmp.eq.s32.totalorder %s136, 0
      %s139 = sadd.s32 %s138, 1
      %s140 = scalar_select %p137, %s138, %s139
      %p143 = pneg %p137
      %p144 = scmp.eq.s32.totalorder %s15, 1
      %p145 = por %p143, %p144
      %p146 = scmp.ne.s32.totalorder %s138, %s141
      %p147 = scmp.eq.s32.totalorder %s15, 0
      %p148 = por %p146, %p147
      %p149 = scmp.ne.s32.totalorder %s138, %s141
      %p150 = scmp.eq.s32.totalorder %s20, 1
      %p151 = por %p149, %p150
      %p152 = scmp.ne.s32.totalorder %s141, %s142
      %p153 = scmp.eq.s32.totalorder %s20, 0
      %p154 = por %p152, %p153
      %p155 = scmp.ne.s32.totalorder %s141, %s142
      %p156 = scmp.eq.s32.totalorder %s21, 1
      %p157 = por %p155, %p156
      %p159 = scmp.ne.s32.totalorder %s142, %s158
      %p160 = scmp.eq.s32.totalorder %s21, 0
      %p161 = por %p159, %p160
      %p162 = scmp.le.s32.totalorder 1, %s15
      %p163 = scmp.lt.s32.totalorder %s15, 3
      %p164 = pnand %p162, %p163
      %p165 = pneg %p164
      // Predicated region
      $region9: #{tpu_custom_call.1} parent=5 // pred_check
        _
      $region10: #{tpu_custom_call.1} parent=5 // pred_check_branch
        %167 = sbr.rel (%p164) target = $region12
      $region11: #{tpu_custom_call.1} parent=5 // pred_region
        %s168 = ssub.s32 %s15, 1
        // Predicated region
        $region13: #{tpu_custom_call.1} parent=11 // pred_check
          %p169 = pneg %p53
        $region14: #{tpu_custom_call.1} parent=11 // pred_check_branch
          %171 = sbr.rel (%p169) target = $region16
        $region15: #{tpu_custom_call.1} parent=11 // pred_region
          %p172 = scmp.lt.s32.totalorder %s24, 0
          %s173 = scalar_select %p172, %s24, 0
          %s174 = smul.addr %s173, 8
          %s175 = scalar_lea.vmem %s0, %s174
        $region16: #{tpu_custom_call.1} parent=11 // pred_fallthru
          _
        // Predicated region
        $region17: #{tpu_custom_call.1} parent=11 // pred_check
          %p176 = pneg %p74
        $region18: #{tpu_custom_call.1} parent=11 // pred_check_branch
          %178 = sbr.rel (%p176) target = $region20
        $region19: #{tpu_custom_call.1} parent=11 // pred_region
          %s180 = ssub.s32 16, 16
          %181 = vsyncadd [#allocation6], %s180
          %s183 = sshll.u32 [#allocation5], 4
          %s184 = int_to_ptr.vmem [resolvable:$true] %s183
          %186 = dma.hbm_to_vmem [thread:$0]  %s1, 16, %s184, [#allocation6]
        $region20: #{tpu_custom_call.1} parent=11 // pred_fallthru
          _
      $region12: #{tpu_custom_call.1} parent=5 // pred_fallthru
        _
      %p187 = scmp.lt.s32.totalorder %s15, 2
      // Predicated region
      $region21: #{tpu_custom_call.1} parent=5 // pred_check
        %p188 = pneg %p187
      $region22: #{tpu_custom_call.1} parent=5 // pred_check_branch
        %190 = sbr.rel (%p188) target = $region24
      $region23: #{tpu_custom_call.1} parent=5 // pred_region
        // Predicated region
        $region25: #{tpu_custom_call.1} parent=23 // pred_check
          %p191 = pneg %p96
        $region26: #{tpu_custom_call.1} parent=23 // pred_check_branch
          %193 = sbr.rel (%p191) target = $region28
        $region27: #{tpu_custom_call.1} parent=23 // pred_region
          %p194 = scmp.lt.s32.totalorder %s22, 0
          %s195 = scalar_select %p194, %s22, 0
          %p196 = scmp.lt.s32.totalorder %s23, 1
          %s197 = scalar_select %p196, %s23, 1
          %s198 = smul.addr %s195, 2
          %s199 = sadd.s32 %s197, %s198
          %s200 = smul.addr %s199, 8
          %s201 = scalar_lea.vmem %s2, %s200
        $region28: #{tpu_custom_call.1} parent=23 // pred_fallthru
          _
        // Predicated region
        $region29: #{tpu_custom_call.1} parent=23 // pred_check
          %p202 = pneg %p122
        $region30: #{tpu_custom_call.1} parent=23 // pred_check_branch
          %204 = sbr.rel (%p202) target = $region32
        $region31: #{tpu_custom_call.1} parent=23 // pred_region
          %s205 = sand.u32 %s112, 1
          %s206 = scalar_lea.sflag [#allocation9], %s205
          %s207 = sand.u32 %s112, 1
          %s208 = smul.addr %s207, 8
          %s209 = scalar_lea.vmem [#allocation8], %s208
          %s211 = ssub.s32 128, 128
          %212 = vsyncadd %s206, %s211
          %s213 = smul.addr %s23, 128
          %s214 = scalar_lea.hbm %s3, %s213
          %s216 = sshll.u32 %s209, 4
          %s217 = int_to_ptr.vmem [resolvable:$true] %s216
          %219 = dma.hbm_to_vmem [thread:$0]  %s214, 128, %s217, %s206
        $region32: #{tpu_custom_call.1} parent=23 // pred_fallthru
          _
      $region24: #{tpu_custom_call.1} parent=5 // pred_fallthru
        _
      %p220 = scmp.le.s32.totalorder 1, %s15
      %p221 = scmp.lt.s32.totalorder %s15, 3
      %p222 = pnand %p220, %p221
      %p223 = pneg %p222
      // Predicated region
      $region33: #{tpu_custom_call.1} parent=5 // pred_check
        _
      $region34: #{tpu_custom_call.1} parent=5 // pred_check_branch
        %225 = sbr.rel (%p222) target = $region36
      $region35: #{tpu_custom_call.1} parent=5 // pred_region
        %s226 = ssub.s32 %s15, 1
        // Predicated region
        $region37: #{tpu_custom_call.1} parent=35 // pred_check
          %p227 = pneg %p74
        $region38: #{tpu_custom_call.1} parent=35 // pred_check_branch
          %229 = sbr.rel (%p227) target = $region40
        $region39: #{tpu_custom_call.1} parent=35 // pred_region
          %230 = dma.done [#allocation6], 16
        $region40: #{tpu_custom_call.1} parent=35 // pred_fallthru
          _
        %s231 = sand.u32 %s115, 1
        %s232 = scalar_lea.sflag [#allocation9], %s231
        %s233 = sand.u32 %s115, 1
        %s234 = smul.addr %s233, 8
        %s235 = scalar_lea.vmem [#allocation8], %s234
        // Predicated region
        $region41: #{tpu_custom_call.1} parent=35 // pred_check
          %p236 = pneg %p128
        $region42: #{tpu_custom_call.1} parent=35 // pred_check_branch
          %238 = sbr.rel (%p236) target = $region44
        $region43: #{tpu_custom_call.1} parent=35 // pred_region
          %239 = dma.done %s232, 128
        $region44: #{tpu_custom_call.1} parent=35 // pred_fallthru
          _
        %p240 = scmp.lt.s32.totalorder %s24, 0
        %s241 = scalar_select %p240, %s24, 0
        %s242 = smul.addr %s241, 8
        %s243 = scalar_lea.vmem %s0, %s242
        %p244 = pneg %p53
        %p245 = pneg %p50
        %p246 = pneg %p74
        %p247 = pneg %p71
        %p248 = scmp.lt.s32.totalorder %s24, 0
        %s249 = scalar_select %p248, %s24, 0
        %p250 = scmp.lt.s32.totalorder %s25, 1
        %s251 = scalar_select %p250, %s25, 1
        %s252 = smul.addr %s249, 2
        %s253 = sadd.s32 %s251, %s252
        %s254 = smul.addr %s253, 8
        %s255 = scalar_lea.vmem %s2, %s254
        %p256 = pneg %p102
        %p257 = pneg %p99
        %s258 = sand.u32 %s115, 1
        %s259 = scalar_lea.sflag [#allocation9], %s258
        %s260 = sand.u32 %s115, 1
        %s261 = smul.addr %s260, 8
        %s262 = scalar_lea.vmem [#allocation8], %s261
        %p263 = pneg %p128
        %p264 = pneg %p125
        %p265 = pneg %p154
        %p266 = pneg %p151
        %p267 = scmp.lt.s32.totalorder %s24, 0
        %s268 = scalar_select %p267, %s24, 0
        %s269 = smul.addr %s268, 8
        %s270 = scalar_lea.vmem %s0, %s269
        %p271 = scmp.lt.s32.totalorder %s24, 0
        %s272 = scalar_select %p271, %s24, 0
        %p273 = scmp.lt.s32.totalorder %s25, 1
        %s274 = scalar_select %p273, %s25, 1
        %s275 = smul.addr %s272, 2
        %s276 = sadd.s32 %s274, %s275
        %s277 = smul.addr %s276, 8
        %s278 = scalar_lea.vmem %s2, %s277
        %p279 = scmp.eq.s32.totalorder %s25, 0
        // Predicated region
        $region45: #{tpu_custom_call.1} parent=35 // pred_check
          %p280 = pneg %p279
        $region46: #{tpu_custom_call.1} parent=35 // pred_check_branch
          %282 = sbr.rel (%p280) target = $region48
        $region47: #{tpu_custom_call.1} parent=35 // pred_region
          %vm283 = vcmask 64512
          %284 = vst.msk [vmem:[#allocation2] sm:$0xff] %vm283, 0.0
          %vm285 = vcmask 7168
          %286 = vst.msk [vmem:[#allocation3] sm:$0xff] %vm285, 0.0
          %287 = vst.msk [vmem:[#allocation4] sm:$0xff] %vm285, 0.0
        $region48: #{tpu_custom_call.1} parent=35 // pred_fallthru
          _
        %v288 = vld [vmem:[%s278] sm:$0xff]
        %v289 = vld [vmem:[%s235] sm:$0xff]
        %v290 = vld [vmem:[#allocation2] sm:$0xff]
        %291 = vmatprep.subr.mxu0 0.0
        %292 = vmatpush1.xpose.msra.mxu0 %v289
        %293 = vmatprep.subr.mxu0 0.0
        %294 = vmatpush1.xpose.msra.mxu0 0.0
        %295 = vmatprep.subr.mxu0 0.0
        %296 = vmatpush1.xpose.msra.mxu0 0.0
        %297 = vmatprep.subr.mxu0 0.0
        %298 = vmatpush1.xpose.msra.mxu0 0.0
        %299 = vmatprep.subr.mxu0 0.0
        %300 = vmatpush1.xpose.msra.mxu0 0.0
        %301 = vmatprep.subr.mxu0 0.0
        %302 = vmatpush1.xpose.msra.mxu0 0.0
        %303 = vmatprep.subr.mxu0 0.0
        %304 = vmatpush1.xpose.msra.mxu0 0.0
        %305 = vmatprep.subr.mxu0 0.0
        %306 = vmatpush1.xpose.msra.mxu0 0.0
        %307 = vmatprep.subr.mxu0 0.0
        %308 = vmatpush1.xpose.msra.mxu0 0.0
        %309 = vmatprep.subr.mxu0 0.0
        %310 = vmatpush1.xpose.msra.mxu0 0.0
        %311 = vmatprep.subr.mxu0 0.0
        %312 = vmatpush1.xpose.msra.mxu0 0.0
        %313 = vmatprep.subr.mxu0 0.0
        %314 = vmatpush1.xpose.msra.mxu0 0.0
        %315 = vmatprep.subr.mxu0 0.0
        %316 = vmatpush1.xpose.msra.mxu0 0.0
        %317 = vmatprep.subr.mxu0 0.0
        %318 = vmatpush1.xpose.msra.mxu0 0.0
        %319 = vmatprep.subr.mxu0 0.0
        %320 = vmatpush1.xpose.msra.mxu0 0.0
        %321 = vmatprep.subr.mxu0 0.0
        %322 = vmatpush1.xpose.msra.mxu0 0.0
        %323 = vmatprep.subr.mxu0 0.0
        %324 = vmatpush1.xpose.msra.mxu0 0.0
        %325 = vmatprep.subr.mxu0 0.0
        %326 = vmatpush1.xpose.msra.mxu0 0.0
        %327 = vmatprep.subr.mxu0 0.0
        %328 = vmatpush1.xpose.msra.mxu0 0.0
        %329 = vmatprep.subr.mxu0 0.0
        %330 = vmatpush1.xpose.msra.mxu0 0.0
        %331 = vmatprep.subr.mxu0 0.0
        %332 = vmatpush1.xpose.msra.mxu0 0.0
        %333 = vmatprep.subr.mxu0 0.0
        %334 = vmatpush1.xpose.msra.mxu0 0.0
        %335 = vmatprep.subr.mxu0 0.0
        %336 = vmatpush1.xpose.msra.mxu0 0.0
        %337 = vmatprep.subr.mxu0 0.0
        %338 = vmatpush1.xpose.msra.mxu0 0.0
        %339 = vmatprep.subr.mxu0 0.0
        %340 = vmatpush1.xpose.msra.mxu0 0.0
        %341 = vmatprep.subr.mxu0 0.0
        %342 = vmatpush1.xpose.msra.mxu0 0.0
        %343 = vmatprep.subr.mxu0 0.0
        %344 = vmatpush1.xpose.msra.mxu0 0.0
        %345 = vmatprep.subr.mxu0 0.0
        %346 = vmatpush1.xpose.msra.mxu0 0.0
        %347 = vmatprep.subr.mxu0 0.0
        %348 = vmatpush1.xpose.msra.mxu0 0.0
        %349 = vmatprep.subr.mxu0 0.0
        %350 = vmatpush1.xpose.msra.mxu0 0.0
        %351 = vmatprep.subr.mxu0 0.0
        %352 = vmatpush1.xpose.msra.mxu0 0.0
        %353 = vmatprep.subr.mxu0 0.0
        %354 = vmatpush1.xpose.msra.mxu0 0.0
        %355 = vmatprep.mubr.f32.mxu0 0.0
        %356 = vmatmul.mubr.f32.gmra.mrb[0].mxu0 %v288
        %v357 = vpop.f32.mrb[0].mxu0
        %v358 = vadd.f32 0.0, %v357
        %v359 = vpop.f32.mrb[0].mxu0
        %360 = vdwg.mxu0
        %v361 = vadd.f32 %v290, %v358
        %vm362 = vcmask 64512
        %363 = vst.msk [vmem:[#allocation2] sm:$0xff] %vm362, %v361
        %v364 = vld [vmem:[#allocation3] sm:$0xff]
        %v365 = vmul.f32 %v288, %v288
        %366 = vadd.xlane.f32.xlu0 %v365
        %v367 = vpop.xlane.xlu0 %366
        %v368 = vadd.f32 %v364, %v367
        %vm369 = vcmask 7168
        %370 = vst.msk [vmem:[#allocation3] sm:$0xff] %vm369, %v368
        %v371 = vld [vmem:[#allocation4] sm:$0xff]
        %v372 = vmul.f32 %v289, %v289
        %373 = vadd.xlane.f32.xlu0 %v372
        %v374 = vpop.xlane.xlu0 %373
        %v375 = vadd.f32 %v371, %v374
        %376 = vst.msk [vmem:[#allocation4] sm:$0xff] %vm369, %v375
        %p377 = scmp.eq.s32.totalorder %s25, 1
        // Predicated region
        $region49: #{tpu_custom_call.1} parent=35 // pred_check
          %p378 = pneg %p377
        $region50: #{tpu_custom_call.1} parent=35 // pred_check_branch
          %380 = sbr.rel (%p378) target = $region52
        $region51: #{tpu_custom_call.1} parent=35 // pred_region
          %v381 = vld [vmem:[#allocation2] sm:$0xff]
          %v382 = vld [vmem:[%s270] sm:$0xff]
          %v383 = vld [vmem:[#allocation5] sm:$0x1]
          %384 = vset.pattern.permute.xlu0 0
          %385 = vperm.xlu0 %384, %v382
          %v386 = vpop.permute.xlu0 %385
          %v387 = vlaneseq
          %v388 = vshrl.u32 %v387, 7
          %v389 = vsub.s32 0, %v388
          %v390 = vrot.slane %v383, %v389
          %vm391 = vcmp.eq.s32.totalorder %v386, %v390
          %v392 = vsel %vm391, 1, 0
          %v393 = vcvt.s32.f32 %v392
          %v394 = vsel %vm362, %v393, 0.0
          %395 = vadd.xlane.f32.xlu0 %v394
          %v396 = vpop.xlane.xlu0 %395
          %v397 = vsel %vm362, %v381, -inf
          %398 = vmax.xlane.f32.xlu0 %v397
          %v399 = vpop.xlane.xlu0 %398
          %v400 = vsub.f32 %v381, %v399
          %v401 = vmul.f32 %v400, 1.442695
          %v402 = vpow.pop %v401
          %v403 = vsel %vm362, %v402, 0.0
          %404 = vadd.xlane.f32.xlu0 %v403
          %v405 = vpop.xlane.xlu0 %404
          %v406 = vlog2.pop %v405
          %v407 = vmul.f32 %v406, 0.6931472
          %v408 = vadd.f32 %v407, %v399
          %v409 = vmul.f32 %v393, %v381
          %v410 = vsel %vm362, %v409, 0.0
          %411 = vadd.xlane.f32.xlu0 %v410
          %v412 = vpop.xlane.xlu0 %411
          %v413 = vrcp.pop %v396
          %v414 = vmul.f32 %v412, %v413
          %v415 = vsub.f32 %v408, %v414
          %v416 = vsel %vm369, %v415, 0.0
          %417 = vadd.xlane.f32.xlu0 %v416
          %v418 = vpop.xlane.xlu0 %417
          %v419 = vrot.slane %v418, 4
          %v420 = vadd.f32 %v418, %v419
          %v421 = vrot.slane %v420, 2
          %v422 = vadd.f32 %v420, %v421
          %v423 = vrot.slane %v422, 1
          %v424 = vadd.f32 %v422, %v423
          %s425 = vtos %v424
          %v426 = vld [vmem:[#allocation3] sm:$0xff]
          %v427 = vsel %vm369, %v426, 0.0
          %428 = vadd.xlane.f32.xlu0 %v427
          %v429 = vpop.xlane.xlu0 %428
          %v430 = vrot.slane %v429, 4
          %v431 = vadd.f32 %v429, %v430
          %v432 = vrot.slane %v431, 2
          %v433 = vadd.f32 %v431, %v432
          %v434 = vrot.slane %v433, 1
          %v435 = vadd.f32 %v433, %v434
          %s436 = vtos %v435
          %v437 = vld [vmem:[#allocation4] sm:$0xff]
          %v438 = vsel %vm369, %v437, 0.0
          %439 = vadd.xlane.f32.xlu0 %v438
          %v440 = vpop.xlane.xlu0 %439
          %v441 = vrot.slane %v440, 4
          %v442 = vadd.f32 %v440, %v441
          %v443 = vrot.slane %v442, 2
          %v444 = vadd.f32 %v442, %v443
          %v445 = vrot.slane %v444, 1
          %v446 = vadd.f32 %v444, %v445
          %s447 = vtos %v446
          %s448 = sadd.f32 %s436, %s447
          %s449 = smul.f32 %s448, 0.005
          %s450 = sadd.f32 %s425, %s449
          %v451 = vstv %s450
          %452 = vst [vmem:[#allocation10] sm:$0xff] %v451
        $region52: #{tpu_custom_call.1} parent=35 // pred_fallthru
          _
        // Predicated region
        $region53: #{tpu_custom_call.1} parent=35 // pred_check
          %p453 = pneg %p151
        $region54: #{tpu_custom_call.1} parent=35 // pred_check_branch
          %455 = sbr.rel (%p453) target = $region56
        $region55: #{tpu_custom_call.1} parent=35 // pred_region
          %s457 = ssub.s32 128, 128
          %458 = vsyncadd [#allocation7], %s457
          %s459 = smul.addr %s24, 128
          %s460 = scalar_lea.hbm %s4, %s459
          %s462 = sshll.u32 [#allocation10], 4
          %s463 = int_to_ptr.vmem [resolvable:$true] %s462
          %465 = dma.vmem_to_hbm [thread:$0]  %s463, 128, %s460, [#allocation7]
        $region56: #{tpu_custom_call.1} parent=35 // pred_fallthru
          _
        // Predicated region
        $region57: #{tpu_custom_call.1} parent=35 // pred_check
          %p466 = pneg %p151
        $region58: #{tpu_custom_call.1} parent=35 // pred_check_branch
          %468 = sbr.rel (%p466) target = $region60
        $region59: #{tpu_custom_call.1} parent=35 // pred_region
          %469 = dma.done [#allocation7], 128
        $region60: #{tpu_custom_call.1} parent=35 // pred_fallthru
          _
      $region36: #{tpu_custom_call.1} parent=5 // pred_fallthru
        _
      %p470 = scmp.le.s32.totalorder 2, %s15
      // Predicated region
      $region61: #{tpu_custom_call.1} parent=5 // pred_check
        %p471 = pneg %p470
      $region62: #{tpu_custom_call.1} parent=5 // pred_check_branch
        %473 = sbr.rel (%p471) target = $region64
      $region63: #{tpu_custom_call.1} parent=5 // pred_region
        %s474 = ssub.s32 %s15, 2
      $region64: #{tpu_custom_call.1} parent=5 // pred_fallthru
        _
    $region6: #{tpu_custom_call.1} parent=1 // loop_footer
      %s19 = sadd.s32 1, %s15
    $region7: #{tpu_custom_call.1} parent=1 // loop_footer_branch
      %14 = sbr.rel target = $region3
    $region8: #{tpu_custom_call.1} parent=1 // loop_exit
      _
    %475 = vsyncpa [#allocation6], 1
    %s476 = scalar_lea.sflag [#allocation6], 1
    %477 = vsyncpa %s476, 1
    %478 = vsyncpa [#allocation9], 1
    %s479 = scalar_lea.sflag [#allocation9], 1
    %480 = vsyncpa %s479, 1
    %481 = vsyncpa [#allocation7], 1
    %s482 = scalar_lea.sflag [#allocation7], 1
    %483 = vsyncpa %s482, 1

</llo_original>
